<compile_context>
chip_gen: v5e
topology: v5e:2x2
jax: 0.10.0
libtpu: 0.0.40
codegen_flags: <defaults>
</compile_context>

<pallas_src>
import math
import jax
import jax.numpy as jnp
from jax.experimental import pallas as pl
from jax.experimental.pallas import tpu as pltpu

# ----- module hyper-parameters (match the PyTorch defaults) ------------------
DIM = 3                        # dimension
DOF = 7                        # degrees of freedom
HIDDEN = [256, 256, 256, 256]  # center_jac_net_arch
IN_SIZE = DOF * 3 + 1          # 22
N_TRIL = DOF * (DOF + 1) // 2  # 28  (tril_indices count)
N_NONZERO = N_TRIL - 1         # 27  (exclude_last_el=True)
OUT_SIZE = N_NONZERO * DIM     # 81
OUT_PAD = 128                  # lane-dense padded output width
INV_SQRT2 = 0.7071067811865476
SQRT_2_OVER_PI = 0.7978845608028654


def _round_up(x, m):
    return ((x + m - 1) // m) * m


def _elementwise_dtype():
    """bf16 elementwise math on v6e/v7x (bf16 VPU/EUP), f32 elsewhere (v5e)."""
    try:
        kind = jax.devices()[0].device_kind.lower()
    except Exception:
        return jnp.float32
    if "v6" in kind or "v7" in kind:
        return jnp.bfloat16
    return jnp.float32


def _gelu_tanh(x):
    # tanh-approximate GELU: routes the transcendental to the EUP slot.
    # (~1e-3 deviation from nn.GELU()'s exact erf form, below bf16 matmul noise.)
    return 0.5 * x * (1.0 + jnp.tanh(SQRT_2_OVER_PI * (x + 0.044715 * x * x * x)))


def _gelu_exact(x):
    # exact erf GELU, used only by the f32 pure-JAX reference below.
    return 0.5 * x * (1.0 + jax.lax.erf(x * INV_SQRT2))


def make_mlp_grad_kernel(ew_dt):
    """Kernel factory; ew_dt is the dtype of the bias-add/GELU path."""

    def kernel(x_ref, w1, b1, w2, b2, w3, b3, w4, b4, w5, b5, out_ref):
        h = x_ref[...]                                   # bf16 (tb, 22)
        for w, b in ((w1, b1), (w2, b2), (w3, b3), (w4, b4)):
            a = jnp.dot(h, w[...], preferred_element_type=jnp.float32)
            a = a.astype(ew_dt) + b[...]                 # bias-add in ew_dt
            h = _gelu_tanh(a).astype(jnp.bfloat16)       # GELU in ew_dt -> bf16
        # output projection (lane-padded to 128 -> unmasked stores), f32 out
        out_ref[...] = jnp.dot(h, w5[...], preferred_element_type=jnp.float32) + b5[...]

    return kernel


def init_params(key):
    """Deterministic PyTorch-Linear-style init: U(-1/sqrt(fan_in), 1/sqrt(fan_in)).

    Weights are stored (in_features, out_features) so the kernel computes
    y = x @ W + b."""
    sizes = [IN_SIZE] + HIDDEN + [OUT_SIZE]
    params = []
    for i in range(len(sizes) - 1):
        fan_in, fan_out = sizes[i], sizes[i + 1]
        key, kw, kb = jax.random.split(key, 3)
        bound = 1.0 / math.sqrt(fan_in)
        w = jax.random.uniform(kw, (fan_in, fan_out), jnp.float32, -bound, bound)
        b = jax.random.uniform(kb, (1, fan_out), jnp.float32, -bound, bound)
        params.extend([w, b])
    return params


def _normalize_inputs(qpos, qvel, ka, t, pos_max, pos_min, vel_max, n_timesteps):
    """f32 normalization (identical to the PyTorch normalize_inputs)."""
    qpos_n = (2.0 * qpos - pos_max - pos_min) / (pos_max - pos_min)
    qvel_n = qvel / vel_max
    t_n = 2.0 * t / n_timesteps - 1.0
    return jnp.concatenate([qpos_n, qvel_n, ka, t_n], axis=-1).astype(jnp.float32)


def mlp_grad_forward(qpos, qvel, ka, t, params,
                     pos_max, pos_min, vel_max, n_timesteps, *, tb=512):
    """JAX glue: f32 normalization, bf16 cast, pad batch/output, call kernel."""
    # Normalize in f32 in the wrapper (trivial XLA work), THEN cast to bf16 so
    # large raw t values do not lose precision in bf16.
    x_norm = _normalize_inputs(qpos, qvel, ka, t,
                               pos_max, pos_min, vel_max, n_timesteps)   # (B, 22)
    B = x_norm.shape[0]

    w1, b1, w2, b2, w3, b3, w4, b4, w5, b5 = params
    ew_dt = _elementwise_dtype()

    # Pad the output projection 81 -> 128 lanes with zero columns.
    w5_p = jnp.pad(w5, ((0, 0), (0, OUT_PAD - OUT_SIZE)))
    b5_p = jnp.pad(b5, ((0, 0), (0, OUT_PAD - OUT_SIZE)))

    # bf16 matmul operands; hidden biases in the elementwise dtype, final bias f32.
    ws = [w.astype(jnp.bfloat16) for w in (w1, w2, w3, w4, w5_p)]
    bs = [b1.astype(ew_dt), b2.astype(ew_dt), b3.astype(ew_dt), b4.astype(ew_dt),
          b5_p.astype(jnp.float32)]

    # Batch tile: big by default (amortize grid-step overhead, fill the MXU),
    # but never larger than the (16-aligned) batch for tiny inputs.
    tb_eff = _round_up(min(tb, _round_up(B, 16)), 16)
    n_tiles = pl.cdiv(B, tb_eff)
    B_pad = n_tiles * tb_eff
    x = jnp.pad(x_norm, ((0, B_pad - B), (0, 0))).astype(jnp.bfloat16)

    # Weight/bias specs: full array, constant index_map -> VMEM-resident.
    wb_specs = []
    for w, b in zip(ws, bs):
        wb_specs.append(pl.BlockSpec(w.shape, lambda i: (0, 0)))
        wb_specs.append(pl.BlockSpec(b.shape, lambda i: (0, 0)))

    flops = 2 * B_pad * (IN_SIZE * 256 + 3 * 256 * 256 + 256 * OUT_PAD)
    bytes_accessed = (x.size * 2 + sum(a.size * 2 for a in ws)
                      + sum(a.size * a.dtype.itemsize for a in bs)
                      + B_pad * OUT_PAD * 4)
    cost = pl.CostEstimate(flops=flops,
                           transcendentals=4 * B_pad * 256,
                           bytes_accessed=bytes_accessed)

    out_flat = pl.pallas_call(
        make_mlp_grad_kernel(ew_dt),
        out_shape=jax.ShapeDtypeStruct((B_pad, OUT_PAD), jnp.float32),
        grid=(n_tiles,),
        in_specs=[pl.BlockSpec((tb_eff, IN_SIZE), lambda i: (i, 0))] + wb_specs,
        out_specs=pl.BlockSpec((tb_eff, OUT_PAD), lambda i: (i, 0)),
        compiler_params=pltpu.CompilerParams(
            # TODO(synk): on v7x verify both TensorCores are busy in xprof;
            # switch to pltpu.CORE_PARALLEL if one TC sits idle.
            dimension_semantics=("parallel",),
            vmem_limit_bytes=32 << 20),
        cost_estimate=cost,
    )(x, *[a for pair in zip(ws, bs) for a in pair])

    return out_flat[:B, :OUT_SIZE].reshape(-1, N_NONZERO, DIM)


def _reference_forward(qpos, qvel, ka, t, params,
                       pos_max, pos_min, vel_max, n_timesteps):
    """Pure-JAX f32 reference (matches the PyTorch forward: exact erf GELU)."""
    x = _normalize_inputs(qpos, qvel, ka, t, pos_max, pos_min, vel_max, n_timesteps)
    w1, b1, w2, b2, w3, b3, w4, b4, w5, b5 = params
    h = _gelu_exact(x @ w1 + b1)
    h = _gelu_exact(h @ w2 + b2)
    h = _gelu_exact(h @ w3 + b3)
    h = _gelu_exact(h @ w4 + b4)
    out = h @ w5 + b5
    return out.reshape(-1, N_NONZERO, DIM)


if __name__ == "__main__":
    key = jax.random.PRNGKey(0)
    kp, kq, kv, ka_key, kt = jax.random.split(key, 5)

    params = init_params(kp)

    # robot buffers (what _setup_robot_params would register), deterministic
    pos_max = jnp.full((DOF,), math.pi, jnp.float32)
    pos_min = jnp.full((DOF,), -math.pi, jnp.float32)
    vel_max = jnp.full((DOF,), 2.0, jnp.float32)
    n_timesteps = 100

    B = 8
    qpos = jax.random.uniform(kq, (B, DOF), jnp.float32, -math.pi, math.pi)
    qvel = jax.random.uniform(kv, (B, DOF), jnp.float32, -2.0, 2.0)
    ka = jax.random.uniform(ka_key, (B, DOF), jnp.float32, -1.0, 1.0)
    t = jax.random.uniform(kt, (B, 1), jnp.float32, 0.0, float(n_timesteps))

    centers_jac = mlp_grad_forward(qpos, qvel, ka, t, params,
                                   pos_max, pos_min, vel_max, n_timesteps)
    jax.block_until_ready(centers_jac)
    assert centers_jac.shape == (B, N_NONZERO, DIM)

    # sanity vs. f32 exact-GELU reference with a mixed abs/rel tolerance
    # (kernel uses bf16 matmuls + tanh-approx GELU -> small expected deviation)
    ref = _reference_forward(qpos, qvel, ka, t, params,
                             pos_max, pos_min, vel_max, n_timesteps)
    err = jnp.abs(centers_jac - ref)
    tol = 5e-2 + 5e-2 * jnp.abs(ref)
    assert bool(jnp.all(err <= tol)), (
        f"max abs err {float(jnp.max(err)):.4e} exceeds mixed tolerance")
    print("KERNEL_OK")
</pallas_src>

<mosaic_0001>
module attributes {stable_mosaic.version = 11 : i64} {
  func.func @kernel(%arg0: i32, %arg1: memref<16x22xbf16, #tpu.memory_space<vmem>>, %arg2: memref<22x256xbf16, #tpu.memory_space<vmem>>, %arg3: memref<1x256xf32, #tpu.memory_space<vmem>>, %arg4: memref<256x256xbf16, #tpu.memory_space<vmem>>, %arg5: memref<1x256xf32, #tpu.memory_space<vmem>>, %arg6: memref<256x256xbf16, #tpu.memory_space<vmem>>, %arg7: memref<1x256xf32, #tpu.memory_space<vmem>>, %arg8: memref<256x256xbf16, #tpu.memory_space<vmem>>, %arg9: memref<1x256xf32, #tpu.memory_space<vmem>>, %arg10: memref<256x128xbf16, #tpu.memory_space<vmem>>, %arg11: memref<1x128xf32, #tpu.memory_space<vmem>>, %arg12: memref<16x128xf32, #tpu.memory_space<vmem>>) attributes {dimension_semantics = [#tpu.dimension_semantics<parallel>], iteration_bounds = array<i64: 1>, scalar_prefetch = 0 : i64, scratch_operands = 0 : i64, tpu.core_type = #tpu.core_type<tc>, window_params = [{transform_indices = @transform_0, window_bounds = array<i64: 16, 22>}, {pipeline_mode = #tpu.pipeline_mode<synchronous>, transform_indices = @transform_1, window_bounds = array<i64: 22, 256>}, {pipeline_mode = #tpu.pipeline_mode<synchronous>, transform_indices = @transform_2, window_bounds = array<i64: 1, 256>}, {pipeline_mode = #tpu.pipeline_mode<synchronous>, transform_indices = @transform_3, window_bounds = array<i64: 256, 256>}, {pipeline_mode = #tpu.pipeline_mode<synchronous>, transform_indices = @transform_4, window_bounds = array<i64: 1, 256>}, {pipeline_mode = #tpu.pipeline_mode<synchronous>, transform_indices = @transform_5, window_bounds = array<i64: 256, 256>}, {pipeline_mode = #tpu.pipeline_mode<synchronous>, transform_indices = @transform_6, window_bounds = array<i64: 1, 256>}, {pipeline_mode = #tpu.pipeline_mode<synchronous>, transform_indices = @transform_7, window_bounds = array<i64: 256, 256>}, {pipeline_mode = #tpu.pipeline_mode<synchronous>, transform_indices = @transform_8, window_bounds = array<i64: 1, 256>}, {pipeline_mode = #tpu.pipeline_mode<synchronous>, transform_indices = @transform_9, window_bounds = array<i64: 256, 128>}, {pipeline_mode = #tpu.pipeline_mode<synchronous>, transform_indices = @transform_10, window_bounds = array<i64: 1, 128>}, {transform_indices = @transform_11, window_bounds = array<i64: 16, 128>}]} {
    %c0 = arith.constant 0 : index
    %c0_0 = arith.constant 0 : index
    %0 = vector.load %arg1[%c0, %c0_0] : memref<16x22xbf16, #tpu.memory_space<vmem>>, vector<16x22xbf16>
    %c0_1 = arith.constant 0 : index
    %c0_2 = arith.constant 0 : index
    %1 = vector.load %arg2[%c0_1, %c0_2] : memref<22x256xbf16, #tpu.memory_space<vmem>>, vector<22x256xbf16>
    %cst = arith.constant dense<0.000000e+00> : vector<16x256xf32>
    %2 = tpu.matmul %0, %1, %cst {dimension_numbers = #tpu.dot_dimension_numbers<[1], [0], [0], [1], [0, 0, 1, 1], [], []>} : vector<16x22xbf16>, vector<22x256xbf16>, vector<16x256xf32> -> vector<16x256xf32>
    %c0_3 = arith.constant 0 : index
    %c0_4 = arith.constant 0 : index
    %3 = vector.load %arg3[%c0_3, %c0_4] : memref<1x256xf32, #tpu.memory_space<vmem>>, vector<1x256xf32>
    %4 = vector.broadcast %3 : vector<1x256xf32> to vector<16x256xf32>
    %5 = arith.addf %2, %4 : vector<16x256xf32>
    %cst_5 = arith.constant 5.000000e-01 : f32
    %6 = vector.broadcast %cst_5 : f32 to vector<16x256xf32>
    %7 = arith.mulf %6, %5 : vector<16x256xf32>
    %cst_6 = arith.constant 4.471500e-02 : f32
    %8 = vector.broadcast %cst_6 : f32 to vector<16x256xf32>
    %9 = arith.mulf %8, %5 : vector<16x256xf32>
    %10 = arith.mulf %9, %5 : vector<16x256xf32>
    %11 = arith.mulf %10, %5 : vector<16x256xf32>
    %12 = arith.addf %5, %11 : vector<16x256xf32>
    %cst_7 = arith.constant 0.797884583 : f32
    %13 = vector.broadcast %cst_7 : f32 to vector<16x256xf32>
    %14 = arith.mulf %13, %12 : vector<16x256xf32>
    %15 = math.tanh %14 : vector<16x256xf32>
    %cst_8 = arith.constant 1.000000e+00 : f32
    %16 = vector.broadcast %cst_8 : f32 to vector<16x256xf32>
    %17 = arith.addf %16, %15 : vector<16x256xf32>
    %18 = arith.mulf %7, %17 : vector<16x256xf32>
    %19 = arith.truncf %18 : vector<16x256xf32> to vector<16x256xbf16>
    %c0_9 = arith.constant 0 : index
    %c0_10 = arith.constant 0 : index
    %20 = vector.load %arg4[%c0_9, %c0_10] : memref<256x256xbf16, #tpu.memory_space<vmem>>, vector<256x256xbf16>
    %cst_11 = arith.constant dense<0.000000e+00> : vector<16x256xf32>
    %21 = tpu.matmul %19, %20, %cst_11 {dimension_numbers = #tpu.dot_dimension_numbers<[1], [0], [0], [1], [0, 0, 1, 1], [], []>} : vector<16x256xbf16>, vector<256x256xbf16>, vector<16x256xf32> -> vector<16x256xf32>
    %c0_12 = arith.constant 0 : index
    %c0_13 = arith.constant 0 : index
    %22 = vector.load %arg5[%c0_12, %c0_13] : memref<1x256xf32, #tpu.memory_space<vmem>>, vector<1x256xf32>
    %23 = vector.broadcast %22 : vector<1x256xf32> to vector<16x256xf32>
    %24 = arith.addf %21, %23 : vector<16x256xf32>
    %cst_14 = arith.constant 5.000000e-01 : f32
    %25 = vector.broadcast %cst_14 : f32 to vector<16x256xf32>
    %26 = arith.mulf %25, %24 : vector<16x256xf32>
    %cst_15 = arith.constant 4.471500e-02 : f32
    %27 = vector.broadcast %cst_15 : f32 to vector<16x256xf32>
    %28 = arith.mulf %27, %24 : vector<16x256xf32>
    %29 = arith.mulf %28, %24 : vector<16x256xf32>
    %30 = arith.mulf %29, %24 : vector<16x256xf32>
    %31 = arith.addf %24, %30 : vector<16x256xf32>
    %cst_16 = arith.constant 0.797884583 : f32
    %32 = vector.broadcast %cst_16 : f32 to vector<16x256xf32>
    %33 = arith.mulf %32, %31 : vector<16x256xf32>
    %34 = math.tanh %33 : vector<16x256xf32>
    %cst_17 = arith.constant 1.000000e+00 : f32
    %35 = vector.broadcast %cst_17 : f32 to vector<16x256xf32>
    %36 = arith.addf %35, %34 : vector<16x256xf32>
    %37 = arith.mulf %26, %36 : vector<16x256xf32>
    %38 = arith.truncf %37 : vector<16x256xf32> to vector<16x256xbf16>
    %c0_18 = arith.constant 0 : index
    %c0_19 = arith.constant 0 : index
    %39 = vector.load %arg6[%c0_18, %c0_19] : memref<256x256xbf16, #tpu.memory_space<vmem>>, vector<256x256xbf16>
    %cst_20 = arith.constant dense<0.000000e+00> : vector<16x256xf32>
    %40 = tpu.matmul %38, %39, %cst_20 {dimension_numbers = #tpu.dot_dimension_numbers<[1], [0], [0], [1], [0, 0, 1, 1], [], []>} : vector<16x256xbf16>, vector<256x256xbf16>, vector<16x256xf32> -> vector<16x256xf32>
    %c0_21 = arith.constant 0 : index
    %c0_22 = arith.constant 0 : index
    %41 = vector.load %arg7[%c0_21, %c0_22] : memref<1x256xf32, #tpu.memory_space<vmem>>, vector<1x256xf32>
    %42 = vector.broadcast %41 : vector<1x256xf32> to vector<16x256xf32>
    %43 = arith.addf %40, %42 : vector<16x256xf32>
    %cst_23 = arith.constant 5.000000e-01 : f32
    %44 = vector.broadcast %cst_23 : f32 to vector<16x256xf32>
    %45 = arith.mulf %44, %43 : vector<16x256xf32>
    %cst_24 = arith.constant 4.471500e-02 : f32
    %46 = vector.broadcast %cst_24 : f32 to vector<16x256xf32>
    %47 = arith.mulf %46, %43 : vector<16x256xf32>
    %48 = arith.mulf %47, %43 : vector<16x256xf32>
    %49 = arith.mulf %48, %43 : vector<16x256xf32>
    %50 = arith.addf %43, %49 : vector<16x256xf32>
    %cst_25 = arith.constant 0.797884583 : f32
    %51 = vector.broadcast %cst_25 : f32 to vector<16x256xf32>
    %52 = arith.mulf %51, %50 : vector<16x256xf32>
    %53 = math.tanh %52 : vector<16x256xf32>
    %cst_26 = arith.constant 1.000000e+00 : f32
    %54 = vector.broadcast %cst_26 : f32 to vector<16x256xf32>
    %55 = arith.addf %54, %53 : vector<16x256xf32>
    %56 = arith.mulf %45, %55 : vector<16x256xf32>
    %57 = arith.truncf %56 : vector<16x256xf32> to vector<16x256xbf16>
    %c0_27 = arith.constant 0 : index
    %c0_28 = arith.constant 0 : index
    %58 = vector.load %arg8[%c0_27, %c0_28] : memref<256x256xbf16, #tpu.memory_space<vmem>>, vector<256x256xbf16>
    %cst_29 = arith.constant dense<0.000000e+00> : vector<16x256xf32>
    %59 = tpu.matmul %57, %58, %cst_29 {dimension_numbers = #tpu.dot_dimension_numbers<[1], [0], [0], [1], [0, 0, 1, 1], [], []>} : vector<16x256xbf16>, vector<256x256xbf16>, vector<16x256xf32> -> vector<16x256xf32>
    %c0_30 = arith.constant 0 : index
    %c0_31 = arith.constant 0 : index
    %60 = vector.load %arg9[%c0_30, %c0_31] : memref<1x256xf32, #tpu.memory_space<vmem>>, vector<1x256xf32>
    %61 = vector.broadcast %60 : vector<1x256xf32> to vector<16x256xf32>
    %62 = arith.addf %59, %61 : vector<16x256xf32>
    %cst_32 = arith.constant 5.000000e-01 : f32
    %63 = vector.broadcast %cst_32 : f32 to vector<16x256xf32>
    %64 = arith.mulf %63, %62 : vector<16x256xf32>
    %cst_33 = arith.constant 4.471500e-02 : f32
    %65 = vector.broadcast %cst_33 : f32 to vector<16x256xf32>
    %66 = arith.mulf %65, %62 : vector<16x256xf32>
    %67 = arith.mulf %66, %62 : vector<16x256xf32>
    %68 = arith.mulf %67, %62 : vector<16x256xf32>
    %69 = arith.addf %62, %68 : vector<16x256xf32>
    %cst_34 = arith.constant 0.797884583 : f32
    %70 = vector.broadcast %cst_34 : f32 to vector<16x256xf32>
    %71 = arith.mulf %70, %69 : vector<16x256xf32>
    %72 = math.tanh %71 : vector<16x256xf32>
    %cst_35 = arith.constant 1.000000e+00 : f32
    %73 = vector.broadcast %cst_35 : f32 to vector<16x256xf32>
    %74 = arith.addf %73, %72 : vector<16x256xf32>
    %75 = arith.mulf %64, %74 : vector<16x256xf32>
    %76 = arith.truncf %75 : vector<16x256xf32> to vector<16x256xbf16>
    %c0_36 = arith.constant 0 : index
    %c0_37 = arith.constant 0 : index
    %77 = vector.load %arg10[%c0_36, %c0_37] : memref<256x128xbf16, #tpu.memory_space<vmem>>, vector<256x128xbf16>
    %cst_38 = arith.constant dense<0.000000e+00> : vector<16x128xf32>
    %78 = tpu.matmul %76, %77, %cst_38 {dimension_numbers = #tpu.dot_dimension_numbers<[1], [0], [0], [1], [0, 0, 1, 1], [], []>} : vector<16x256xbf16>, vector<256x128xbf16>, vector<16x128xf32> -> vector<16x128xf32>
    %c0_39 = arith.constant 0 : index
    %c0_40 = arith.constant 0 : index
    %79 = vector.load %arg11[%c0_39, %c0_40] : memref<1x128xf32, #tpu.memory_space<vmem>>, vector<1x128xf32>
    %80 = vector.broadcast %79 : vector<1x128xf32> to vector<16x128xf32>
    %81 = arith.addf %78, %80 : vector<16x128xf32>
    %c0_41 = arith.constant 0 : index
    %c0_42 = arith.constant 0 : index
    %82 = vector.load %arg12[%c0_41, %c0_42] : memref<16x128xf32, #tpu.memory_space<vmem>>, vector<16x128xf32>
    tpu.vector_store %arg12[%c0_41, %c0_42], %81 {strides = array<i32>} : memref<16x128xf32, #tpu.memory_space<vmem>>, vector<16x128xf32>,
    return
  }
  func.func @transform_0(%arg0: i32) -> (i32, i32) {
    %c0_i32 = arith.constant 0 : i32
    %c0_i32_0 = arith.constant 0 : i32
    return %arg0, %c0_i32 : i32, i32
  }
  func.func @transform_1(%arg0: i32) -> (i32, i32) {
    %c0_i32 = arith.constant 0 : i32
    %c0_i32_0 = arith.constant 0 : i32
    %c0_i32_1 = arith.constant 0 : i32
    return %c0_i32, %c0_i32_0 : i32, i32
  }
  func.func @transform_2(%arg0: i32) -> (i32, i32) {
    %c0_i32 = arith.constant 0 : i32
    %c0_i32_0 = arith.constant 0 : i32
    %c0_i32_1 = arith.constant 0 : i32
    return %c0_i32, %c0_i32_0 : i32, i32
  }
  func.func @transform_3(%arg0: i32) -> (i32, i32) {
    %c0_i32 = arith.constant 0 : i32
    %c0_i32_0 = arith.constant 0 : i32
    %c0_i32_1 = arith.constant 0 : i32
    return %c0_i32, %c0_i32_0 : i32, i32
  }
  func.func @transform_4(%arg0: i32) -> (i32, i32) {
    %c0_i32 = arith.constant 0 : i32
    %c0_i32_0 = arith.constant 0 : i32
    %c0_i32_1 = arith.constant 0 : i32
    return %c0_i32, %c0_i32_0 : i32, i32
  }
  func.func @transform_5(%arg0: i32) -> (i32, i32) {
    %c0_i32 = arith.constant 0 : i32
    %c0_i32_0 = arith.constant 0 : i32
    %c0_i32_1 = arith.constant 0 : i32
    return %c0_i32, %c0_i32_0 : i32, i32
  }
  func.func @transform_6(%arg0: i32) -> (i32, i32) {
    %c0_i32 = arith.constant 0 : i32
    %c0_i32_0 = arith.constant 0 : i32
    %c0_i32_1 = arith.constant 0 : i32
    return %c0_i32, %c0_i32_0 : i32, i32
  }
  func.func @transform_7(%arg0: i32) -> (i32, i32) {
    %c0_i32 = arith.constant 0 : i32
    %c0_i32_0 = arith.constant 0 : i32
    %c0_i32_1 = arith.constant 0 : i32
    return %c0_i32, %c0_i32_0 : i32, i32
  }
  func.func @transform_8(%arg0: i32) -> (i32, i32) {
    %c0_i32 = arith.constant 0 : i32
    %c0_i32_0 = arith.constant 0 : i32
    %c0_i32_1 = arith.constant 0 : i32
    return %c0_i32, %c0_i32_0 : i32, i32
  }
  func.func @transform_9(%arg0: i32) -> (i32, i32) {
    %c0_i32 = arith.constant 0 : i32
    %c0_i32_0 = arith.constant 0 : i32
    %c0_i32_1 = arith.constant 0 : i32
    return %c0_i32, %c0_i32_0 : i32, i32
  }
  func.func @transform_10(%arg0: i32) -> (i32, i32) {
    %c0_i32 = arith.constant 0 : i32
    %c0_i32_0 = arith.constant 0 : i32
    %c0_i32_1 = arith.constant 0 : i32
    return %c0_i32, %c0_i32_0 : i32, i32
  }
  func.func @transform_11(%arg0: i32) -> (i32, i32) {
    %c0_i32 = arith.constant 0 : i32
    %c0_i32_0 = arith.constant 0 : i32
    return %arg0, %c0_i32 : i32, i32
  }
}

</mosaic_0001>

<llo_original>
// kernel: tpu_custom_call.1
$region0: #{tpu_custom_call.1}
  #allocation0 [shape = 'u32[]', space=smem, size = 0x4, offset = 0x4, fixed_abs, tag = 'smem constant byte address 0x4 - core index']
  #allocation1 [shape = 'u32[72,128]{1,0:T(1,128)}', space=vmem, size = 0x9000, scoped, tag = 'internal scratch']
  %s0 = inlined_call_operand.hbm [shape: bf16[16,22], index: 0, kind: input, shape index: {}]
  %s1 = inlined_call_operand.hbm [shape: bf16[22,256], index: 1, kind: input, shape index: {}]
  %s2 = inlined_call_operand.hbm [shape: f32[1,256], index: 2, kind: input, shape index: {}]
  %s3 = inlined_call_operand.hbm [shape: bf16[256,256], index: 3, kind: input, shape index: {}]
  %s4 = inlined_call_operand.vmem [shape: f32[1,256], index: 4, kind: input, shape index: {}]
  %s5 = inlined_call_operand.hbm [shape: bf16[256,256], index: 5, kind: input, shape index: {}]
  %s6 = inlined_call_operand.vmem [shape: f32[1,256], index: 6, kind: input, shape index: {}]
  %s7 = inlined_call_operand.hbm [shape: bf16[256,256], index: 7, kind: input, shape index: {}]
  %s8 = inlined_call_operand.vmem [shape: f32[1,256], index: 8, kind: input, shape index: {}]
  %s9 = inlined_call_operand.hbm [shape: bf16[256,128], index: 9, kind: input, shape index: {}]
  %s10 = inlined_call_operand.vmem [shape: f32[1,128], index: 10, kind: input, shape index: {}]
  %s11 = inlined_call_operand.hbm [shape: f32[16,128], index: 11, kind: output, shape index: {}]
  %s12 = sld [smem:[#allocation0]]
  $region82: #{tpu_custom_call.1} parent=0
    _
  %s14 = ssub.s32 1, %s12
  %s15 = scalar_select 0, %s14, %s12
  $region1: #{tpu_custom_call.1} parent=0
    #allocation2 [shape = 'u8[4096]{0}', space=vmem, size = 0x1000, scoped, tag = 'input window, operand 0, single buffered']
    #allocation3 [shape = 's32[1]{0}', space=sflag, size = 0x4, scoped, tag = 'scoped memory for tpu_custom_call.1']
    #allocation4 [shape = 's32[1]{0}', space=sflag, size = 0x4, scoped, tag = 'scoped memory for tpu_custom_call.1']
    #allocation5 [shape = 'u8[12288]{0}', space=vmem, size = 0x3000, scoped, tag = 'input window, operand 1, single buffered']
    #allocation6 [shape = 's32[1]{0}', space=sflag, size = 0x4, scoped, tag = 'scoped memory for tpu_custom_call.1']
    #allocation7 [shape = 'u8[1024]{0}', space=vmem, size = 0x400, scoped, tag = 'input window, operand 2, single buffered']
    #allocation8 [shape = 'u8[131072]{0}', space=vmem, size = 0x20000, scoped, tag = 'input window, operand 3, single buffered']
    #allocation9 [shape = 's32[1]{0}', space=sflag, size = 0x4, scoped, tag = 'scoped memory for tpu_custom_call.1']
    #allocation10 [shape = 'u8[131072]{0}', space=vmem, size = 0x20000, scoped, tag = 'input window, operand 5, single buffered']
    #allocation11 [shape = 'u8[131072]{0}', space=vmem, size = 0x20000, scoped, tag = 'input window, operand 7, single buffered']
    #allocation12 [shape = 's32[1]{0}', space=sflag, size = 0x4, scoped, tag = 'scoped memory for tpu_custom_call.1']
    #allocation13 [shape = 'u8[65536]{0}', space=vmem, size = 0x10000, scoped, tag = 'input window, operand 9, single buffered']
    #allocation14 [shape = 'u8[8192]{0}', space=vmem, size = 0x2000, scoped, tag = 'output window, operand 0, single buffered']
    %16 = vsyncpa [#allocation3], 0
    %17 = vsyncpa [#allocation6], 0
    %18 = vsyncpa [#allocation9], 0
    %19 = vsyncpa [#allocation12], 0
    %20 = vsyncpa [#allocation4], 0
    // Predicated region
    $region2: #{tpu_custom_call.1} parent=1 // pred_check
      _
    $region3: #{tpu_custom_call.1} parent=1 // pred_check_branch
      %22 = sbr.rel (0) target = $region5
    $region4: #{tpu_custom_call.1} parent=1 // pred_region
      %24 = vsyncadd [#allocation3], 0
      %s25 = sshll.u32 %s0, 4
      %s26 = int_to_ptr.hbm [resolvable:$true] %s25
      %s27 = sshll.u32 [#allocation2], 4
      %s28 = int_to_ptr.vmem [resolvable:$true] %s27
      %33 = dma.hbm_to_vmem [thread:$0]  %s26, 128, %s28, [#allocation3], 64, 64, 4
    $region5: #{tpu_custom_call.1} parent=1 // pred_fallthru
      _
    // Predicated region
    $region6: #{tpu_custom_call.1} parent=1 // pred_check
      _
    $region7: #{tpu_custom_call.1} parent=1 // pred_check_branch
      %35 = sbr.rel (0) target = $region9
    $region8: #{tpu_custom_call.1} parent=1 // pred_region
      %37 = vsyncadd [#allocation6], 0
      %s38 = sshll.u32 %s1, 4
      %s39 = int_to_ptr.hbm [resolvable:$true] %s38
      %s40 = sshll.u32 [#allocation5], 4
      %s41 = int_to_ptr.vmem [resolvable:$true] %s40
      %46 = dma.hbm_to_vmem [thread:$0]  %s39, 384, %s41, [#allocation6], 128, 128, 8
    $region9: #{tpu_custom_call.1} parent=1 // pred_fallthru
      _
    // Predicated region
    $region10: #{tpu_custom_call.1} parent=1 // pred_check
      _
    $region11: #{tpu_custom_call.1} parent=1 // pred_check_branch
      %48 = sbr.rel (0) target = $region13
    $region12: #{tpu_custom_call.1} parent=1 // pred_region
      %50 = vsyncadd [#allocation6], 0
      %s52 = sshll.u32 %s2, 4
      %s53 = int_to_ptr.hbm [resolvable:$true] %s52
      %s54 = sshll.u32 [#allocation7], 4
      %s55 = int_to_ptr.vmem [resolvable:$true] %s54
      %57 = dma.hbm_to_vmem [thread:$0]  %s53, 32, %s55, [#allocation6]
    $region13: #{tpu_custom_call.1} parent=1 // pred_fallthru
      _
    // Predicated region
    $region14: #{tpu_custom_call.1} parent=1 // pred_check
      _
    $region15: #{tpu_custom_call.1} parent=1 // pred_check_branch
      %59 = sbr.rel (0) target = $region17
    $region16: #{tpu_custom_call.1} parent=1 // pred_region
      %61 = vsyncadd [#allocation9], 0
      %s62 = sshll.u32 %s3, 4
      %s63 = int_to_ptr.hbm [resolvable:$true] %s62
      %s64 = sshll.u32 [#allocation8], 4
      %s65 = int_to_ptr.vmem [resolvable:$true] %s64
      %70 = dma.hbm_to_vmem [thread:$0]  %s63, 4096, %s65, [#allocation9], 128, 128, 8
    $region17: #{tpu_custom_call.1} parent=1 // pred_fallthru
      _
    // Predicated region
    $region18: #{tpu_custom_call.1} parent=1 // pred_check
      _
    $region19: #{tpu_custom_call.1} parent=1 // pred_check_branch
      %72 = sbr.rel (0) target = $region21
    $region20: #{tpu_custom_call.1} parent=1 // pred_region
      _
    $region21: #{tpu_custom_call.1} parent=1 // pred_fallthru
      _
    // Predicated region
    $region22: #{tpu_custom_call.1} parent=1 // pred_check
      _
    $region23: #{tpu_custom_call.1} parent=1 // pred_check_branch
      %74 = sbr.rel (0) target = $region25
    $region24: #{tpu_custom_call.1} parent=1 // pred_region
      %76 = vsyncadd [#allocation9], 0
      %s77 = sshll.u32 %s5, 4
      %s78 = int_to_ptr.hbm [resolvable:$true] %s77
      %s79 = sshll.u32 [#allocation10], 4
      %s80 = int_to_ptr.vmem [resolvable:$true] %s79
      %85 = dma.hbm_to_vmem [thread:$0]  %s78, 4096, %s80, [#allocation9], 128, 128, 8
    $region25: #{tpu_custom_call.1} parent=1 // pred_fallthru
      _
    // Predicated region
    $region26: #{tpu_custom_call.1} parent=1 // pred_check
      _
    $region27: #{tpu_custom_call.1} parent=1 // pred_check_branch
      %87 = sbr.rel (0) target = $region29
    $region28: #{tpu_custom_call.1} parent=1 // pred_region
      _
    $region29: #{tpu_custom_call.1} parent=1 // pred_fallthru
      _
    // Predicated region
    $region30: #{tpu_custom_call.1} parent=1 // pred_check
      _
    $region31: #{tpu_custom_call.1} parent=1 // pred_check_branch
      %89 = sbr.rel (0) target = $region33
    $region32: #{tpu_custom_call.1} parent=1 // pred_region
      %91 = vsyncadd [#allocation12], 0
      %s92 = sshll.u32 %s7, 4
      %s93 = int_to_ptr.hbm [resolvable:$true] %s92
      %s94 = sshll.u32 [#allocation11], 4
      %s95 = int_to_ptr.vmem [resolvable:$true] %s94
      %100 = dma.hbm_to_vmem [thread:$0]  %s93, 4096, %s95, [#allocation12], 128, 128, 8
    $region33: #{tpu_custom_call.1} parent=1 // pred_fallthru
      _
    // Predicated region
    $region34: #{tpu_custom_call.1} parent=1 // pred_check
      _
    $region35: #{tpu_custom_call.1} parent=1 // pred_check_branch
      %102 = sbr.rel (0) target = $region37
    $region36: #{tpu_custom_call.1} parent=1 // pred_region
      _
    $region37: #{tpu_custom_call.1} parent=1 // pred_fallthru
      _
    // Predicated region
    $region38: #{tpu_custom_call.1} parent=1 // pred_check
      _
    $region39: #{tpu_custom_call.1} parent=1 // pred_check_branch
      %104 = sbr.rel (0) target = $region41
    $region40: #{tpu_custom_call.1} parent=1 // pred_region
      %106 = vsyncadd [#allocation12], 0
      %s107 = sshll.u32 %s9, 4
      %s108 = int_to_ptr.hbm [resolvable:$true] %s107
      %s109 = sshll.u32 [#allocation13], 4
      %s110 = int_to_ptr.vmem [resolvable:$true] %s109
      %115 = dma.hbm_to_vmem [thread:$0]  %s108, 2048, %s110, [#allocation12], 64, 64, 4
    $region41: #{tpu_custom_call.1} parent=1 // pred_fallthru
      _
    // Predicated region
    $region42: #{tpu_custom_call.1} parent=1 // pred_check
      _
    $region43: #{tpu_custom_call.1} parent=1 // pred_check_branch
      %117 = sbr.rel (0) target = $region45
    $region44: #{tpu_custom_call.1} parent=1 // pred_region
      _
    $region45: #{tpu_custom_call.1} parent=1 // pred_fallthru
      _
    // Predicated region
    $region46: #{tpu_custom_call.1} parent=1 // pred_check
      _
    $region47: #{tpu_custom_call.1} parent=1 // pred_check_branch
      %119 = sbr.rel (0) target = $region49
    $region48: #{tpu_custom_call.1} parent=1 // pred_region
      %121 = dma.done [#allocation3], 128
    $region49: #{tpu_custom_call.1} parent=1 // pred_fallthru
      _
    // Predicated region
    $region50: #{tpu_custom_call.1} parent=1 // pred_check
      _
    $region51: #{tpu_custom_call.1} parent=1 // pred_check_branch
      %123 = sbr.rel (0) target = $region53
    $region52: #{tpu_custom_call.1} parent=1 // pred_region
      %125 = dma.done [#allocation6], 384
    $region53: #{tpu_custom_call.1} parent=1 // pred_fallthru
      _
    // Predicated region
    $region54: #{tpu_custom_call.1} parent=1 // pred_check
      _
    $region55: #{tpu_custom_call.1} parent=1 // pred_check_branch
      %127 = sbr.rel (0) target = $region57
    $region56: #{tpu_custom_call.1} parent=1 // pred_region
      %129 = dma.done [#allocation6], 32
    $region57: #{tpu_custom_call.1} parent=1 // pred_fallthru
      _
    // Predicated region
    $region58: #{tpu_custom_call.1} parent=1 // pred_check
      _
    $region59: #{tpu_custom_call.1} parent=1 // pred_check_branch
      %131 = sbr.rel (0) target = $region61
    $region60: #{tpu_custom_call.1} parent=1 // pred_region
      %133 = dma.done [#allocation9], 4096
    $region61: #{tpu_custom_call.1} parent=1 // pred_fallthru
      _
    // Predicated region
    $region62: #{tpu_custom_call.1} parent=1 // pred_check
      _
    $region63: #{tpu_custom_call.1} parent=1 // pred_check_branch
      %135 = sbr.rel (0) target = $region65
    $region64: #{tpu_custom_call.1} parent=1 // pred_region
      %137 = dma.done [#allocation9], 4096
    $region65: #{tpu_custom_call.1} parent=1 // pred_fallthru
      _
    // Predicated region
    $region66: #{tpu_custom_call.1} parent=1 // pred_check
      _
    $region67: #{tpu_custom_call.1} parent=1 // pred_check_branch
      %139 = sbr.rel (0) target = $region69
    $region68: #{tpu_custom_call.1} parent=1 // pred_region
      %141 = dma.done [#allocation12], 4096
    $region69: #{tpu_custom_call.1} parent=1 // pred_fallthru
      _
    // Predicated region
    $region70: #{tpu_custom_call.1} parent=1 // pred_check
      _
    $region71: #{tpu_custom_call.1} parent=1 // pred_check_branch
      %143 = sbr.rel (0) target = $region73
    $region72: #{tpu_custom_call.1} parent=1 // pred_region
      %145 = dma.done [#allocation12], 2048
    $region73: #{tpu_custom_call.1} parent=1 // pred_fallthru
      _
    %v147 = vld [vmem:[#allocation2] sm:$0xf]
    %v148 = vld [vmem:[#allocation2 + $0x4] sm:$0xf]
    %v149 = vld [vmem:[#allocation5] sm:$0xff]
    %v150 = vld [vmem:[#allocation5 + $0x8] sm:$0xff]
    %v151 = vld [vmem:[#allocation5 + $0x10] sm:$0x77]
    %v152 = vld [vmem:[#allocation7] sm:$0x3]
    %v154 = vperm.slane %v152, 0
    %v155 = vperm.slane %v152, 1
    %v160 = vunpack.c.l.b16 %v147
    %v161 = vunpack.c.l.b16 %v148
    %v162 = vpack.c.b16 %v161, %v160
    %v166 = vunpack.c.l.b16 %v149
    %v167 = vunpack.c.h.b16 %v149
    %v168 = vunpack.c.l.b16 %v150
    %v169 = vunpack.c.h.b16 %v150
    %v170 = vunpack.c.l.b16 %v151
    %v171 = vunpack.c.h.b16 %v151
    %v172 = vpack.c.b16 %v168, %v166
    %v173 = vpack.c.b16 %v169, %v167
    %v174 = vpack.c.b16 %v170, %v170
    %v175 = vpack.c.b16 %v171, %v171
    %vm178 = vcmask 179200
    %v180 = vsel %vm178, %v162, 0
    %vm182 = vcmask 1042432
    %v184 = vsel %vm182, %v174, 0
    %v187 = vsel %vm182, %v175, 0
    %189 = vmatpush.bf16.msra.mxu0 0
    %190 = vmatpush.bf16.msra.mxu0 0
    %191 = vmatpush.bf16.msra.mxu0 0
    %192 = vmatpush.bf16.msra.mxu0 0
    %193 = vmatpush.bf16.msra.mxu0 0
    %194 = vmatpush.bf16.msra.mxu0 0
    %195 = vmatpush.bf16.msra.mxu0 %v184
    %196 = vmatpush.bf16.msra.mxu0 %v172
    %197 = vmatmul.bf16.gmra.mxu0 %v180
    %v198 = vpop.f32.mrf.mxu0
    %v199 = vadd.f32 %v154, %v198
    %v200 = vpop.f32.mrf.mxu0
    %v201 = vadd.f32 %v154, %v200
    %202 = vdwg.mxu0
    %203 = vmatpush.bf16.msra.mxu0 0
    %204 = vmatpush.bf16.msra.mxu0 0
    %205 = vmatpush.bf16.msra.mxu0 0
    %206 = vmatpush.bf16.msra.mxu0 0
    %207 = vmatpush.bf16.msra.mxu0 0
    %208 = vmatpush.bf16.msra.mxu0 0
    %209 = vmatpush.bf16.msra.mxu0 %v187
    %210 = vmatpush.bf16.msra.mxu0 %v173
    %211 = vmatmul.bf16.gmra.mxu0 %v180
    %v212 = vpop.f32.mrf.mxu0
    %v213 = vadd.f32 %v155, %v212
    %v214 = vpop.f32.mrf.mxu0
    %v215 = vadd.f32 %v155, %v214
    %216 = vdwg.mxu0
    %v217 = vmul.f32 %v199, 0.5
    %v218 = vmul.f32 %v213, 0.5
    %v219 = vmul.f32 %v201, 0.5
    %v220 = vmul.f32 %v215, 0.5
    %v221 = vmul.f32 %v199, 0.044715
    %v222 = vmul.f32 %v213, 0.044715
    %v223 = vmul.f32 %v201, 0.044715
    %v224 = vmul.f32 %v215, 0.044715
    %v225 = vmul.f32 %v221, %v199
    %v226 = vmul.f32 %v222, %v213
    %v227 = vmul.f32 %v223, %v201
    %v228 = vmul.f32 %v224, %v215
    %v229 = vmul.f32 %v225, %v199
    %v230 = vmul.f32 %v226, %v213
    %v231 = vmul.f32 %v227, %v201
    %v232 = vmul.f32 %v228, %v215
    %v233 = vadd.f32 %v199, %v229
    %v234 = vadd.f32 %v213, %v230
    %v235 = vadd.f32 %v201, %v231
    %v236 = vadd.f32 %v215, %v232
    %v237 = vmul.f32 %v233, 0.7978846
    %v238 = vmul.f32 %v234, 0.7978846
    %v239 = vmul.f32 %v235, 0.7978846
    %v240 = vmul.f32 %v236, 0.7978846
    %v241 = vtanh.pop %v237
    %v242 = vtanh.pop %v238
    %v243 = vtanh.pop %v239
    %v244 = vtanh.pop %v240
    %v245 = vadd.f32 %v241, 1.0
    %v246 = vadd.f32 %v242, 1.0
    %v247 = vadd.f32 %v243, 1.0
    %v248 = vadd.f32 %v244, 1.0
    %v249 = vmul.f32 %v217, %v245
    %v250 = vmul.f32 %v218, %v246
    %v251 = vmul.f32 %v219, %v247
    %v252 = vmul.f32 %v220, %v248
    %v253 = vpack.c.bf16 %v251, %v249
    %v254 = vpack.c.bf16 %v252, %v250
    %v255 = vld [vmem:[#allocation8] sm:$0xff]
    %v256 = vld [vmem:[#allocation8 + $0x8] sm:$0xff]
    %v257 = vld [vmem:[#allocation8 + $0x10] sm:$0xff]
    %v258 = vld [vmem:[#allocation8 + $0x18] sm:$0xff]
    %v259 = vld [vmem:[#allocation8 + $0x20] sm:$0xff]
    %v260 = vld [vmem:[#allocation8 + $0x28] sm:$0xff]
    %v261 = vld [vmem:[#allocation8 + $0x30] sm:$0xff]
    %v262 = vld [vmem:[#allocation8 + $0x38] sm:$0xff]
    %v263 = vld [vmem:[#allocation8 + $0x40] sm:$0xff]
    %v264 = vld [vmem:[#allocation8 + $0x48] sm:$0xff]
    %v265 = vld [vmem:[#allocation8 + $0x50] sm:$0xff]
    %v266 = vld [vmem:[#allocation8 + $0x58] sm:$0xff]
    %v267 = vld [vmem:[#allocation8 + $0x60] sm:$0xff]
    %v268 = vld [vmem:[#allocation8 + $0x68] sm:$0xff]
    %v269 = vld [vmem:[#allocation8 + $0x70] sm:$0xff]
    %v270 = vld [vmem:[#allocation8 + $0x78] sm:$0xff]
    %v271 = vld [vmem:[#allocation8 + $0x80] sm:$0xff]
    %v272 = vld [vmem:[#allocation8 + $0x88] sm:$0xff]
    %v273 = vld [vmem:[#allocation8 + $0x90] sm:$0xff]
    %v274 = vld [vmem:[#allocation8 + $0x98] sm:$0xff]
    %v275 = vld [vmem:[#allocation8 + $0xa0] sm:$0xff]
    %v276 = vld [vmem:[#allocation8 + $0xa8] sm:$0xff]
    %v277 = vld [vmem:[#allocation8 + $0xb0] sm:$0xff]
    %v278 = vld [vmem:[#allocation8 + $0xb8] sm:$0xff]
    %v279 = vld [vmem:[#allocation8 + $0xc0] sm:$0xff]
    %v280 = vld [vmem:[#allocation8 + $0xc8] sm:$0xff]
    %v281 = vld [vmem:[#allocation8 + $0xd0] sm:$0xff]
    %v282 = vld [vmem:[#allocation8 + $0xd8] sm:$0xff]
    %v283 = vld [vmem:[#allocation8 + $0xe0] sm:$0xff]
    %v284 = vld [vmem:[#allocation8 + $0xe8] sm:$0xff]
    %v285 = vld [vmem:[#allocation8 + $0xf0] sm:$0xff]
    %v286 = vld [vmem:[#allocation8 + $0xf8] sm:$0xff]
    %v287 = vld [vmem:[%s4] sm:$0x3]
    %v289 = vperm.slane %v287, 0
    %v290 = vperm.slane %v287, 1
    %v325 = vunpack.c.l.b16 %v255
    %v326 = vunpack.c.h.b16 %v255
    %v327 = vunpack.c.l.b16 %v256
    %v328 = vunpack.c.h.b16 %v256
    %v329 = vunpack.c.l.b16 %v257
    %v330 = vunpack.c.h.b16 %v257
    %v331 = vunpack.c.l.b16 %v258
    %v332 = vunpack.c.h.b16 %v258
    %v333 = vunpack.c.l.b16 %v259
    %v334 = vunpack.c.h.b16 %v259
    %v335 = vunpack.c.l.b16 %v260
    %v336 = vunpack.c.h.b16 %v260
    %v337 = vunpack.c.l.b16 %v261
    %v338 = vunpack.c.h.b16 %v261
    %v339 = vunpack.c.l.b16 %v262
    %v340 = vunpack.c.h.b16 %v262
    %v341 = vunpack.c.l.b16 %v263
    %v342 = vunpack.c.h.b16 %v263
    %v343 = vunpack.c.l.b16 %v264
    %v344 = vunpack.c.h.b16 %v264
    %v345 = vunpack.c.l.b16 %v265
    %v346 = vunpack.c.h.b16 %v265
    %v347 = vunpack.c.l.b16 %v266
    %v348 = vunpack.c.h.b16 %v266
    %v349 = vunpack.c.l.b16 %v267
    %v350 = vunpack.c.h.b16 %v267
    %v351 = vunpack.c.l.b16 %v268
    %v352 = vunpack.c.h.b16 %v268
    %v353 = vunpack.c.l.b16 %v269
    %v354 = vunpack.c.h.b16 %v269
    %v355 = vunpack.c.l.b16 %v270
    %v356 = vunpack.c.h.b16 %v270
    %v357 = vunpack.c.l.b16 %v271
    %v358 = vunpack.c.h.b16 %v271
    %v359 = vunpack.c.l.b16 %v272
    %v360 = vunpack.c.h.b16 %v272
    %v361 = vunpack.c.l.b16 %v273
    %v362 = vunpack.c.h.b16 %v273
    %v363 = vunpack.c.l.b16 %v274
    %v364 = vunpack.c.h.b16 %v274
    %v365 = vunpack.c.l.b16 %v275
    %v366 = vunpack.c.h.b16 %v275
    %v367 = vunpack.c.l.b16 %v276
    %v368 = vunpack.c.h.b16 %v276
    %v369 = vunpack.c.l.b16 %v277
    %v370 = vunpack.c.h.b16 %v277
    %v371 = vunpack.c.l.b16 %v278
    %v372 = vunpack.c.h.b16 %v278
    %v373 = vunpack.c.l.b16 %v279
    %v374 = vunpack.c.h.b16 %v279
    %v375 = vunpack.c.l.b16 %v280
    %v376 = vunpack.c.h.b16 %v280
    %v377 = vunpack.c.l.b16 %v281
    %v378 = vunpack.c.h.b16 %v281
    %v379 = vunpack.c.l.b16 %v282
    %v380 = vunpack.c.h.b16 %v282
    %v381 = vunpack.c.l.b16 %v283
    %v382 = vunpack.c.h.b16 %v283
    %v383 = vunpack.c.l.b16 %v284
    %v384 = vunpack.c.h.b16 %v284
    %v385 = vunpack.c.l.b16 %v285
    %v386 = vunpack.c.h.b16 %v285
    %v387 = vunpack.c.l.b16 %v286
    %v388 = vunpack.c.h.b16 %v286
    %v389 = vpack.c.b16 %v327, %v325
    %v390 = vpack.c.b16 %v328, %v326
    %v391 = vpack.c.b16 %v331, %v329
    %v392 = vpack.c.b16 %v332, %v330
    %v393 = vpack.c.b16 %v335, %v333
    %v394 = vpack.c.b16 %v336, %v334
    %v395 = vpack.c.b16 %v339, %v337
    %v396 = vpack.c.b16 %v340, %v338
    %v397 = vpack.c.b16 %v343, %v341
    %v398 = vpack.c.b16 %v344, %v342
    %v399 = vpack.c.b16 %v347, %v345
    %v400 = vpack.c.b16 %v348, %v346
    %v401 = vpack.c.b16 %v351, %v349
    %v402 = vpack.c.b16 %v352, %v350
    %v403 = vpack.c.b16 %v355, %v353
    %v404 = vpack.c.b16 %v356, %v354
    %v405 = vpack.c.b16 %v359, %v357
    %v406 = vpack.c.b16 %v360, %v358
    %v407 = vpack.c.b16 %v363, %v361
    %v408 = vpack.c.b16 %v364, %v362
    %v409 = vpack.c.b16 %v367, %v365
    %v410 = vpack.c.b16 %v368, %v366
    %v411 = vpack.c.b16 %v371, %v369
    %v412 = vpack.c.b16 %v372, %v370
    %v413 = vpack.c.b16 %v375, %v373
    %v414 = vpack.c.b16 %v376, %v374
    %v415 = vpack.c.b16 %v379, %v377
    %v416 = vpack.c.b16 %v380, %v378
    %v417 = vpack.c.b16 %v383, %v381
    %v418 = vpack.c.b16 %v384, %v382
    %v419 = vpack.c.b16 %v387, %v385
    %v420 = vpack.c.b16 %v388, %v386
    %453 = vmatpush.bf16.msra.mxu0 %v403
    %454 = vmatpush.bf16.msra.mxu0 %v401
    %455 = vmatpush.bf16.msra.mxu0 %v399
    %456 = vmatpush.bf16.msra.mxu0 %v397
    %457 = vmatpush.bf16.msra.mxu0 %v395
    %458 = vmatpush.bf16.msra.mxu0 %v393
    %459 = vmatpush.bf16.msra.mxu0 %v391
    %460 = vmatpush.bf16.msra.mxu0 %v389
    %461 = vmatmul.bf16.gmra.mxu0 %v253
    %v462 = vpop.f32.mrf.mxu0
    %v463 = vadd.f32 %v289, %v462
    %v464 = vpop.f32.mrf.mxu0
    %v465 = vadd.f32 %v289, %v464
    %466 = vdwg.mxu0
    %467 = vmatpush.bf16.msra.mxu0 %v419
    %468 = vmatpush.bf16.msra.mxu0 %v417
    %469 = vmatpush.bf16.msra.mxu0 %v415
    %470 = vmatpush.bf16.msra.mxu0 %v413
    %471 = vmatpush.bf16.msra.mxu0 %v411
    %472 = vmatpush.bf16.msra.mxu0 %v409
    %473 = vmatpush.bf16.msra.mxu0 %v407
    %474 = vmatpush.bf16.msra.mxu0 %v405
    %475 = vmatmul.bf16.gmra.mxu0 %v254
    %v476 = vpop.f32.mrf.mxu0
    %v477 = vadd.f32 %v463, %v476
    %v478 = vpop.f32.mrf.mxu0
    %v479 = vadd.f32 %v465, %v478
    %480 = vdwg.mxu0
    %481 = vmatpush.bf16.msra.mxu0 %v404
    %482 = vmatpush.bf16.msra.mxu0 %v402
    %483 = vmatpush.bf16.msra.mxu0 %v400
    %484 = vmatpush.bf16.msra.mxu0 %v398
    %485 = vmatpush.bf16.msra.mxu0 %v396
    %486 = vmatpush.bf16.msra.mxu0 %v394
    %487 = vmatpush.bf16.msra.mxu0 %v392
    %488 = vmatpush.bf16.msra.mxu0 %v390
    %489 = vmatmul.bf16.gmra.mxu0 %v253
    %v490 = vpop.f32.mrf.mxu0
    %v491 = vadd.f32 %v290, %v490
    %v492 = vpop.f32.mrf.mxu0
    %v493 = vadd.f32 %v290, %v492
    %494 = vdwg.mxu0
    %495 = vmatpush.bf16.msra.mxu0 %v420
    %496 = vmatpush.bf16.msra.mxu0 %v418
    %497 = vmatpush.bf16.msra.mxu0 %v416
    %498 = vmatpush.bf16.msra.mxu0 %v414
    %499 = vmatpush.bf16.msra.mxu0 %v412
    %500 = vmatpush.bf16.msra.mxu0 %v410
    %501 = vmatpush.bf16.msra.mxu0 %v408
    %502 = vmatpush.bf16.msra.mxu0 %v406
    %503 = vmatmul.bf16.gmra.mxu0 %v254
    %v504 = vpop.f32.mrf.mxu0
    %v505 = vadd.f32 %v491, %v504
    %v506 = vpop.f32.mrf.mxu0
    %v507 = vadd.f32 %v493, %v506
    %508 = vdwg.mxu0
    %v509 = vmul.f32 %v477, 0.5
    %v510 = vmul.f32 %v505, 0.5
    %v511 = vmul.f32 %v479, 0.5
    %v512 = vmul.f32 %v507, 0.5
    %v513 = vmul.f32 %v477, 0.044715
    %v514 = vmul.f32 %v505, 0.044715
    %v515 = vmul.f32 %v479, 0.044715
    %v516 = vmul.f32 %v507, 0.044715
    %v517 = vmul.f32 %v513, %v477
    %v518 = vmul.f32 %v514, %v505
    %v519 = vmul.f32 %v515, %v479
    %v520 = vmul.f32 %v516, %v507
    %v521 = vmul.f32 %v517, %v477
    %v522 = vmul.f32 %v518, %v505
    %v523 = vmul.f32 %v519, %v479
    %v524 = vmul.f32 %v520, %v507
    %v525 = vadd.f32 %v477, %v521
    %v526 = vadd.f32 %v505, %v522
    %v527 = vadd.f32 %v479, %v523
    %v528 = vadd.f32 %v507, %v524
    %v529 = vmul.f32 %v525, 0.7978846
    %v530 = vmul.f32 %v526, 0.7978846
    %v531 = vmul.f32 %v527, 0.7978846
    %v532 = vmul.f32 %v528, 0.7978846
    %v533 = vtanh.pop %v529
    %v534 = vtanh.pop %v530
    %v535 = vtanh.pop %v531
    %v536 = vtanh.pop %v532
    %v537 = vadd.f32 %v533, 1.0
    %v538 = vadd.f32 %v534, 1.0
    %v539 = vadd.f32 %v535, 1.0
    %v540 = vadd.f32 %v536, 1.0
    %v541 = vmul.f32 %v509, %v537
    %v542 = vmul.f32 %v510, %v538
    %v543 = vmul.f32 %v511, %v539
    %v544 = vmul.f32 %v512, %v540
    %v545 = vpack.c.bf16 %v543, %v541
    %v546 = vpack.c.bf16 %v544, %v542
    %v547 = vld [vmem:[#allocation10] sm:$0xff]
    %v548 = vld [vmem:[#allocation10 + $0x8] sm:$0xff]
    %v549 = vld [vmem:[#allocation10 + $0x10] sm:$0xff]
    %v550 = vld [vmem:[#allocation10 + $0x18] sm:$0xff]
    %v551 = vld [vmem:[#allocation10 + $0x20] sm:$0xff]
    %v552 = vld [vmem:[#allocation10 + $0x28] sm:$0xff]
    %v553 = vld [vmem:[#allocation10 + $0x30] sm:$0xff]
    %v554 = vld [vmem:[#allocation10 + $0x38] sm:$0xff]
    %v555 = vld [vmem:[#allocation10 + $0x40] sm:$0xff]
    %v556 = vld [vmem:[#allocation10 + $0x48] sm:$0xff]
    %v557 = vld [vmem:[#allocation10 + $0x50] sm:$0xff]
    %v558 = vld [vmem:[#allocation10 + $0x58] sm:$0xff]
    %v559 = vld [vmem:[#allocation10 + $0x60] sm:$0xff]
    %v560 = vld [vmem:[#allocation10 + $0x68] sm:$0xff]
    %v561 = vld [vmem:[#allocation10 + $0x70] sm:$0xff]
    %v562 = vld [vmem:[#allocation10 + $0x78] sm:$0xff]
    %v563 = vld [vmem:[#allocation10 + $0x80] sm:$0xff]
    %v564 = vld [vmem:[#allocation10 + $0x88] sm:$0xff]
    %v565 = vld [vmem:[#allocation10 + $0x90] sm:$0xff]
    %v566 = vld [vmem:[#allocation10 + $0x98] sm:$0xff]
    %v567 = vld [vmem:[#allocation10 + $0xa0] sm:$0xff]
    %v568 = vld [vmem:[#allocation10 + $0xa8] sm:$0xff]
    %v569 = vld [vmem:[#allocation10 + $0xb0] sm:$0xff]
    %v570 = vld [vmem:[#allocation10 + $0xb8] sm:$0xff]
    %v571 = vld [vmem:[#allocation10 + $0xc0] sm:$0xff]
    %v572 = vld [vmem:[#allocation10 + $0xc8] sm:$0xff]
    %v573 = vld [vmem:[#allocation10 + $0xd0] sm:$0xff]
    %v574 = vld [vmem:[#allocation10 + $0xd8] sm:$0xff]
    %v575 = vld [vmem:[#allocation10 + $0xe0] sm:$0xff]
    %v576 = vld [vmem:[#allocation10 + $0xe8] sm:$0xff]
    %v577 = vld [vmem:[#allocation10 + $0xf0] sm:$0xff]
    %v578 = vld [vmem:[#allocation10 + $0xf8] sm:$0xff]
    %v579 = vld [vmem:[%s6] sm:$0x3]
    %v581 = vperm.slane %v579, 0
    %v582 = vperm.slane %v579, 1
    %v617 = vunpack.c.l.b16 %v547
    %v618 = vunpack.c.h.b16 %v547
    %v619 = vunpack.c.l.b16 %v548
    %v620 = vunpack.c.h.b16 %v548
    %v621 = vunpack.c.l.b16 %v549
    %v622 = vunpack.c.h.b16 %v549
    %v623 = vunpack.c.l.b16 %v550
    %v624 = vunpack.c.h.b16 %v550
    %v625 = vunpack.c.l.b16 %v551
    %v626 = vunpack.c.h.b16 %v551
    %v627 = vunpack.c.l.b16 %v552
    %v628 = vunpack.c.h.b16 %v552
    %v629 = vunpack.c.l.b16 %v553
    %v630 = vunpack.c.h.b16 %v553
    %v631 = vunpack.c.l.b16 %v554
    %v632 = vunpack.c.h.b16 %v554
    %v633 = vunpack.c.l.b16 %v555
    %v634 = vunpack.c.h.b16 %v555
    %v635 = vunpack.c.l.b16 %v556
    %v636 = vunpack.c.h.b16 %v556
    %v637 = vunpack.c.l.b16 %v557
    %v638 = vunpack.c.h.b16 %v557
    %v639 = vunpack.c.l.b16 %v558
    %v640 = vunpack.c.h.b16 %v558
    %v641 = vunpack.c.l.b16 %v559
    %v642 = vunpack.c.h.b16 %v559
    %v643 = vunpack.c.l.b16 %v560
    %v644 = vunpack.c.h.b16 %v560
    %v645 = vunpack.c.l.b16 %v561
    %v646 = vunpack.c.h.b16 %v561
    %v647 = vunpack.c.l.b16 %v562
    %v648 = vunpack.c.h.b16 %v562
    %v649 = vunpack.c.l.b16 %v563
    %v650 = vunpack.c.h.b16 %v563
    %v651 = vunpack.c.l.b16 %v564
    %v652 = vunpack.c.h.b16 %v564
    %v653 = vunpack.c.l.b16 %v565
    %v654 = vunpack.c.h.b16 %v565
    %v655 = vunpack.c.l.b16 %v566
    %v656 = vunpack.c.h.b16 %v566
    %v657 = vunpack.c.l.b16 %v567
    %v658 = vunpack.c.h.b16 %v567
    %v659 = vunpack.c.l.b16 %v568
    %v660 = vunpack.c.h.b16 %v568
    %v661 = vunpack.c.l.b16 %v569
    %v662 = vunpack.c.h.b16 %v569
    %v663 = vunpack.c.l.b16 %v570
    %v664 = vunpack.c.h.b16 %v570
    %v665 = vunpack.c.l.b16 %v571
    %v666 = vunpack.c.h.b16 %v571
    %v667 = vunpack.c.l.b16 %v572
    %v668 = vunpack.c.h.b16 %v572
    %v669 = vunpack.c.l.b16 %v573
    %v670 = vunpack.c.h.b16 %v573
    %v671 = vunpack.c.l.b16 %v574
    %v672 = vunpack.c.h.b16 %v574
    %v673 = vunpack.c.l.b16 %v575
    %v674 = vunpack.c.h.b16 %v575
    %v675 = vunpack.c.l.b16 %v576
    %v676 = vunpack.c.h.b16 %v576
    %v677 = vunpack.c.l.b16 %v577
    %v678 = vunpack.c.h.b16 %v577
    %v679 = vunpack.c.l.b16 %v578
    %v680 = vunpack.c.h.b16 %v578
    %v681 = vpack.c.b16 %v619, %v617
    %v682 = vpack.c.b16 %v620, %v618
    %v683 = vpack.c.b16 %v623, %v621
    %v684 = vpack.c.b16 %v624, %v622
    %v685 = vpack.c.b16 %v627, %v625
    %v686 = vpack.c.b16 %v628, %v626
    %v687 = vpack.c.b16 %v631, %v629
    %v688 = vpack.c.b16 %v632, %v630
    %v689 = vpack.c.b16 %v635, %v633
    %v690 = vpack.c.b16 %v636, %v634
    %v691 = vpack.c.b16 %v639, %v637
    %v692 = vpack.c.b16 %v640, %v638
    %v693 = vpack.c.b16 %v643, %v641
    %v694 = vpack.c.b16 %v644, %v642
    %v695 = vpack.c.b16 %v647, %v645
    %v696 = vpack.c.b16 %v648, %v646
    %v697 = vpack.c.b16 %v651, %v649
    %v698 = vpack.c.b16 %v652, %v650
    %v699 = vpack.c.b16 %v655, %v653
    %v700 = vpack.c.b16 %v656, %v654
    %v701 = vpack.c.b16 %v659, %v657
    %v702 = vpack.c.b16 %v660, %v658
    %v703 = vpack.c.b16 %v663, %v661
    %v704 = vpack.c.b16 %v664, %v662
    %v705 = vpack.c.b16 %v667, %v665
    %v706 = vpack.c.b16 %v668, %v666
    %v707 = vpack.c.b16 %v671, %v669
    %v708 = vpack.c.b16 %v672, %v670
    %v709 = vpack.c.b16 %v675, %v673
    %v710 = vpack.c.b16 %v676, %v674
    %v711 = vpack.c.b16 %v679, %v677
    %v712 = vpack.c.b16 %v680, %v678
    %745 = vmatpush.bf16.msra.mxu0 %v695
    %746 = vmatpush.bf16.msra.mxu0 %v693
    %747 = vmatpush.bf16.msra.mxu0 %v691
    %748 = vmatpush.bf16.msra.mxu0 %v689
    %749 = vmatpush.bf16.msra.mxu0 %v687
    %750 = vmatpush.bf16.msra.mxu0 %v685
    %751 = vmatpush.bf16.msra.mxu0 %v683
    %752 = vmatpush.bf16.msra.mxu0 %v681
    %753 = vmatmul.bf16.gmra.mxu0 %v545
    %v754 = vpop.f32.mrf.mxu0
    %v755 = vadd.f32 %v581, %v754
    %v756 = vpop.f32.mrf.mxu0
    %v757 = vadd.f32 %v581, %v756
    %758 = vdwg.mxu0
    %759 = vmatpush.bf16.msra.mxu0 %v711
    %760 = vmatpush.bf16.msra.mxu0 %v709
    %761 = vmatpush.bf16.msra.mxu0 %v707
    %762 = vmatpush.bf16.msra.mxu0 %v705
    %763 = vmatpush.bf16.msra.mxu0 %v703
    %764 = vmatpush.bf16.msra.mxu0 %v701
    %765 = vmatpush.bf16.msra.mxu0 %v699
    %766 = vmatpush.bf16.msra.mxu0 %v697
    %767 = vmatmul.bf16.gmra.mxu0 %v546
    %v768 = vpop.f32.mrf.mxu0
    %v769 = vadd.f32 %v755, %v768
    %v770 = vpop.f32.mrf.mxu0
    %v771 = vadd.f32 %v757, %v770
    %772 = vdwg.mxu0
    %773 = vmatpush.bf16.msra.mxu0 %v696
    %774 = vmatpush.bf16.msra.mxu0 %v694
    %775 = vmatpush.bf16.msra.mxu0 %v692
    %776 = vmatpush.bf16.msra.mxu0 %v690
    %777 = vmatpush.bf16.msra.mxu0 %v688
    %778 = vmatpush.bf16.msra.mxu0 %v686
    %779 = vmatpush.bf16.msra.mxu0 %v684
    %780 = vmatpush.bf16.msra.mxu0 %v682
    %781 = vmatmul.bf16.gmra.mxu0 %v545
    %v782 = vpop.f32.mrf.mxu0
    %v783 = vadd.f32 %v582, %v782
    %v784 = vpop.f32.mrf.mxu0
    %v785 = vadd.f32 %v582, %v784
    %786 = vdwg.mxu0
    %787 = vmatpush.bf16.msra.mxu0 %v712
    %788 = vmatpush.bf16.msra.mxu0 %v710
    %789 = vmatpush.bf16.msra.mxu0 %v708
    %790 = vmatpush.bf16.msra.mxu0 %v706
    %791 = vmatpush.bf16.msra.mxu0 %v704
    %792 = vmatpush.bf16.msra.mxu0 %v702
    %793 = vmatpush.bf16.msra.mxu0 %v700
    %794 = vmatpush.bf16.msra.mxu0 %v698
    %795 = vmatmul.bf16.gmra.mxu0 %v546
    %v796 = vpop.f32.mrf.mxu0
    %v797 = vadd.f32 %v783, %v796
    %v798 = vpop.f32.mrf.mxu0
    %v799 = vadd.f32 %v785, %v798
    %800 = vdwg.mxu0
    %v801 = vmul.f32 %v769, 0.5
    %v802 = vmul.f32 %v797, 0.5
    %v803 = vmul.f32 %v771, 0.5
    %v804 = vmul.f32 %v799, 0.5
    %v805 = vmul.f32 %v769, 0.044715
    %v806 = vmul.f32 %v797, 0.044715
    %v807 = vmul.f32 %v771, 0.044715
    %v808 = vmul.f32 %v799, 0.044715
    %v809 = vmul.f32 %v805, %v769
    %v810 = vmul.f32 %v806, %v797
    %v811 = vmul.f32 %v807, %v771
    %v812 = vmul.f32 %v808, %v799
    %v813 = vmul.f32 %v809, %v769
    %v814 = vmul.f32 %v810, %v797
    %v815 = vmul.f32 %v811, %v771
    %v816 = vmul.f32 %v812, %v799
    %v817 = vadd.f32 %v769, %v813
    %v818 = vadd.f32 %v797, %v814
    %v819 = vadd.f32 %v771, %v815
    %v820 = vadd.f32 %v799, %v816
    %v821 = vmul.f32 %v817, 0.7978846
    %v822 = vmul.f32 %v818, 0.7978846
    %v823 = vmul.f32 %v819, 0.7978846
    %v824 = vmul.f32 %v820, 0.7978846
    %v825 = vtanh.pop %v821
    %v826 = vtanh.pop %v822
    %v827 = vtanh.pop %v823
    %v828 = vtanh.pop %v824
    %v829 = vadd.f32 %v825, 1.0
    %v830 = vadd.f32 %v826, 1.0
    %v831 = vadd.f32 %v827, 1.0
    %v832 = vadd.f32 %v828, 1.0
    %v833 = vmul.f32 %v801, %v829
    %v834 = vmul.f32 %v802, %v830
    %v835 = vmul.f32 %v803, %v831
    %v836 = vmul.f32 %v804, %v832
    %v837 = vpack.c.bf16 %v835, %v833
    %v838 = vpack.c.bf16 %v836, %v834
    %v839 = vld [vmem:[#allocation11] sm:$0xff]
    %v840 = vld [vmem:[#allocation11 + $0x8] sm:$0xff]
    %v841 = vld [vmem:[#allocation11 + $0x10] sm:$0xff]
    %v842 = vld [vmem:[#allocation11 + $0x18] sm:$0xff]
    %v843 = vld [vmem:[#allocation11 + $0x20] sm:$0xff]
    %v844 = vld [vmem:[#allocation11 + $0x28] sm:$0xff]
    %v845 = vld [vmem:[#allocation11 + $0x30] sm:$0xff]
    %v846 = vld [vmem:[#allocation11 + $0x38] sm:$0xff]
    %v847 = vld [vmem:[#allocation11 + $0x40] sm:$0xff]
    %v848 = vld [vmem:[#allocation11 + $0x48] sm:$0xff]
    %v849 = vld [vmem:[#allocation11 + $0x50] sm:$0xff]
    %v850 = vld [vmem:[#allocation11 + $0x58] sm:$0xff]
    %v851 = vld [vmem:[#allocation11 + $0x60] sm:$0xff]
    %v852 = vld [vmem:[#allocation11 + $0x68] sm:$0xff]
    %v853 = vld [vmem:[#allocation11 + $0x70] sm:$0xff]
    %v854 = vld [vmem:[#allocation11 + $0x78] sm:$0xff]
    %v855 = vld [vmem:[#allocation11 + $0x80] sm:$0xff]
    %v856 = vld [vmem:[#allocation11 + $0x88] sm:$0xff]
    %v857 = vld [vmem:[#allocation11 + $0x90] sm:$0xff]
    %v858 = vld [vmem:[#allocation11 + $0x98] sm:$0xff]
    %v859 = vld [vmem:[#allocation11 + $0xa0] sm:$0xff]
    %v860 = vld [vmem:[#allocation11 + $0xa8] sm:$0xff]
    %v861 = vld [vmem:[#allocation11 + $0xb0] sm:$0xff]
    %v862 = vld [vmem:[#allocation11 + $0xb8] sm:$0xff]
    %v863 = vld [vmem:[#allocation11 + $0xc0] sm:$0xff]
    %v864 = vld [vmem:[#allocation11 + $0xc8] sm:$0xff]
    %v865 = vld [vmem:[#allocation11 + $0xd0] sm:$0xff]
    %v866 = vld [vmem:[#allocation11 + $0xd8] sm:$0xff]
    %v867 = vld [vmem:[#allocation11 + $0xe0] sm:$0xff]
    %v868 = vld [vmem:[#allocation11 + $0xe8] sm:$0xff]
    %v869 = vld [vmem:[#allocation11 + $0xf0] sm:$0xff]
    %v870 = vld [vmem:[#allocation11 + $0xf8] sm:$0xff]
    %v871 = vld [vmem:[%s8] sm:$0x3]
    %v873 = vperm.slane %v871, 0
    %v874 = vperm.slane %v871, 1
    %v909 = vunpack.c.l.b16 %v839
    %v910 = vunpack.c.h.b16 %v839
    %v911 = vunpack.c.l.b16 %v840
    %v912 = vunpack.c.h.b16 %v840
    %v913 = vunpack.c.l.b16 %v841
    %v914 = vunpack.c.h.b16 %v841
    %v915 = vunpack.c.l.b16 %v842
    %v916 = vunpack.c.h.b16 %v842
    %v917 = vunpack.c.l.b16 %v843
    %v918 = vunpack.c.h.b16 %v843
    %v919 = vunpack.c.l.b16 %v844
    %v920 = vunpack.c.h.b16 %v844
    %v921 = vunpack.c.l.b16 %v845
    %v922 = vunpack.c.h.b16 %v845
    %v923 = vunpack.c.l.b16 %v846
    %v924 = vunpack.c.h.b16 %v846
    %v925 = vunpack.c.l.b16 %v847
    %v926 = vunpack.c.h.b16 %v847
    %v927 = vunpack.c.l.b16 %v848
    %v928 = vunpack.c.h.b16 %v848
    %v929 = vunpack.c.l.b16 %v849
    %v930 = vunpack.c.h.b16 %v849
    %v931 = vunpack.c.l.b16 %v850
    %v932 = vunpack.c.h.b16 %v850
    %v933 = vunpack.c.l.b16 %v851
    %v934 = vunpack.c.h.b16 %v851
    %v935 = vunpack.c.l.b16 %v852
    %v936 = vunpack.c.h.b16 %v852
    %v937 = vunpack.c.l.b16 %v853
    %v938 = vunpack.c.h.b16 %v853
    %v939 = vunpack.c.l.b16 %v854
    %v940 = vunpack.c.h.b16 %v854
    %v941 = vunpack.c.l.b16 %v855
    %v942 = vunpack.c.h.b16 %v855
    %v943 = vunpack.c.l.b16 %v856
    %v944 = vunpack.c.h.b16 %v856
    %v945 = vunpack.c.l.b16 %v857
    %v946 = vunpack.c.h.b16 %v857
    %v947 = vunpack.c.l.b16 %v858
    %v948 = vunpack.c.h.b16 %v858
    %v949 = vunpack.c.l.b16 %v859
    %v950 = vunpack.c.h.b16 %v859
    %v951 = vunpack.c.l.b16 %v860
    %v952 = vunpack.c.h.b16 %v860
    %v953 = vunpack.c.l.b16 %v861
    %v954 = vunpack.c.h.b16 %v861
    %v955 = vunpack.c.l.b16 %v862
    %v956 = vunpack.c.h.b16 %v862
    %v957 = vunpack.c.l.b16 %v863
    %v958 = vunpack.c.h.b16 %v863
    %v959 = vunpack.c.l.b16 %v864
    %v960 = vunpack.c.h.b16 %v864
    %v961 = vunpack.c.l.b16 %v865
    %v962 = vunpack.c.h.b16 %v865
    %v963 = vunpack.c.l.b16 %v866
    %v964 = vunpack.c.h.b16 %v866
    %v965 = vunpack.c.l.b16 %v867
    %v966 = vunpack.c.h.b16 %v867
    %v967 = vunpack.c.l.b16 %v868
    %v968 = vunpack.c.h.b16 %v868
    %v969 = vunpack.c.l.b16 %v869
    %v970 = vunpack.c.h.b16 %v869
    %v971 = vunpack.c.l.b16 %v870
    %v972 = vunpack.c.h.b16 %v870
    %v973 = vpack.c.b16 %v911, %v909
    %v974 = vpack.c.b16 %v912, %v910
    %v975 = vpack.c.b16 %v915, %v913
    %v976 = vpack.c.b16 %v916, %v914
    %v977 = vpack.c.b16 %v919, %v917
    %v978 = vpack.c.b16 %v920, %v918
    %v979 = vpack.c.b16 %v923, %v921
    %v980 = vpack.c.b16 %v924, %v922
    %v981 = vpack.c.b16 %v927, %v925
    %v982 = vpack.c.b16 %v928, %v926
    %v983 = vpack.c.b16 %v931, %v929
    %v984 = vpack.c.b16 %v932, %v930
    %v985 = vpack.c.b16 %v935, %v933
    %v986 = vpack.c.b16 %v936, %v934
    %v987 = vpack.c.b16 %v939, %v937
    %v988 = vpack.c.b16 %v940, %v938
    %v989 = vpack.c.b16 %v943, %v941
    %v990 = vpack.c.b16 %v944, %v942
    %v991 = vpack.c.b16 %v947, %v945
    %v992 = vpack.c.b16 %v948, %v946
    %v993 = vpack.c.b16 %v951, %v949
    %v994 = vpack.c.b16 %v952, %v950
    %v995 = vpack.c.b16 %v955, %v953
    %v996 = vpack.c.b16 %v956, %v954
    %v997 = vpack.c.b16 %v959, %v957
    %v998 = vpack.c.b16 %v960, %v958
    %v999 = vpack.c.b16 %v963, %v961
    %v1000 = vpack.c.b16 %v964, %v962
    %v1001 = vpack.c.b16 %v967, %v965
    %v1002 = vpack.c.b16 %v968, %v966
    %v1003 = vpack.c.b16 %v971, %v969
    %v1004 = vpack.c.b16 %v972, %v970
    %1037 = vmatpush.bf16.msra.mxu0 %v987
    %1038 = vmatpush.bf16.msra.mxu0 %v985
    %1039 = vmatpush.bf16.msra.mxu0 %v983
    %1040 = vmatpush.bf16.msra.mxu0 %v981
    %1041 = vmatpush.bf16.msra.mxu0 %v979
    %1042 = vmatpush.bf16.msra.mxu0 %v977
    %1043 = vmatpush.bf16.msra.mxu0 %v975
    %1044 = vmatpush.bf16.msra.mxu0 %v973
    %1045 = vmatmul.bf16.gmra.mxu0 %v837
    %v1046 = vpop.f32.mrf.mxu0
    %v1047 = vadd.f32 %v873, %v1046
    %v1048 = vpop.f32.mrf.mxu0
    %v1049 = vadd.f32 %v873, %v1048
    %1050 = vdwg.mxu0
    %1051 = vmatpush.bf16.msra.mxu0 %v1003
    %1052 = vmatpush.bf16.msra.mxu0 %v1001
    %1053 = vmatpush.bf16.msra.mxu0 %v999
    %1054 = vmatpush.bf16.msra.mxu0 %v997
    %1055 = vmatpush.bf16.msra.mxu0 %v995
    %1056 = vmatpush.bf16.msra.mxu0 %v993
    %1057 = vmatpush.bf16.msra.mxu0 %v991
    %1058 = vmatpush.bf16.msra.mxu0 %v989
    %1059 = vmatmul.bf16.gmra.mxu0 %v838
    %v1060 = vpop.f32.mrf.mxu0
    %v1061 = vadd.f32 %v1047, %v1060
    %v1062 = vpop.f32.mrf.mxu0
    %v1063 = vadd.f32 %v1049, %v1062
    %1064 = vdwg.mxu0
    %1065 = vmatpush.bf16.msra.mxu0 %v988
    %1066 = vmatpush.bf16.msra.mxu0 %v986
    %1067 = vmatpush.bf16.msra.mxu0 %v984
    %1068 = vmatpush.bf16.msra.mxu0 %v982
    %1069 = vmatpush.bf16.msra.mxu0 %v980
    %1070 = vmatpush.bf16.msra.mxu0 %v978
    %1071 = vmatpush.bf16.msra.mxu0 %v976
    %1072 = vmatpush.bf16.msra.mxu0 %v974
    %1073 = vmatmul.bf16.gmra.mxu0 %v837
    %v1074 = vpop.f32.mrf.mxu0
    %v1075 = vadd.f32 %v874, %v1074
    %v1076 = vpop.f32.mrf.mxu0
    %v1077 = vadd.f32 %v874, %v1076
    %1078 = vdwg.mxu0
    %1079 = vmatpush.bf16.msra.mxu0 %v1004
    %1080 = vmatpush.bf16.msra.mxu0 %v1002
    %1081 = vmatpush.bf16.msra.mxu0 %v1000
    %1082 = vmatpush.bf16.msra.mxu0 %v998
    %1083 = vmatpush.bf16.msra.mxu0 %v996
    %1084 = vmatpush.bf16.msra.mxu0 %v994
    %1085 = vmatpush.bf16.msra.mxu0 %v992
    %1086 = vmatpush.bf16.msra.mxu0 %v990
    %1087 = vmatmul.bf16.gmra.mxu0 %v838
    %v1088 = vpop.f32.mrf.mxu0
    %v1089 = vadd.f32 %v1075, %v1088
    %v1090 = vpop.f32.mrf.mxu0
    %v1091 = vadd.f32 %v1077, %v1090
    %1092 = vdwg.mxu0
    %v1093 = vmul.f32 %v1061, 0.5
    %v1094 = vmul.f32 %v1089, 0.5
    %v1095 = vmul.f32 %v1063, 0.5
    %v1096 = vmul.f32 %v1091, 0.5
    %v1097 = vmul.f32 %v1061, 0.044715
    %v1098 = vmul.f32 %v1089, 0.044715
    %v1099 = vmul.f32 %v1063, 0.044715
    %v1100 = vmul.f32 %v1091, 0.044715
    %v1101 = vmul.f32 %v1097, %v1061
    %v1102 = vmul.f32 %v1098, %v1089
    %v1103 = vmul.f32 %v1099, %v1063
    %v1104 = vmul.f32 %v1100, %v1091
    %v1105 = vmul.f32 %v1101, %v1061
    %v1106 = vmul.f32 %v1102, %v1089
    %v1107 = vmul.f32 %v1103, %v1063
    %v1108 = vmul.f32 %v1104, %v1091
    %v1109 = vadd.f32 %v1061, %v1105
    %v1110 = vadd.f32 %v1089, %v1106
    %v1111 = vadd.f32 %v1063, %v1107
    %v1112 = vadd.f32 %v1091, %v1108
    %v1113 = vmul.f32 %v1109, 0.7978846
    %v1114 = vmul.f32 %v1110, 0.7978846
    %v1115 = vmul.f32 %v1111, 0.7978846
    %v1116 = vmul.f32 %v1112, 0.7978846
    %v1117 = vtanh.pop %v1113
    %v1118 = vtanh.pop %v1114
    %v1119 = vtanh.pop %v1115
    %v1120 = vtanh.pop %v1116
    %v1121 = vadd.f32 %v1117, 1.0
    %v1122 = vadd.f32 %v1118, 1.0
    %v1123 = vadd.f32 %v1119, 1.0
    %v1124 = vadd.f32 %v1120, 1.0
    %v1125 = vmul.f32 %v1093, %v1121
    %v1126 = vmul.f32 %v1094, %v1122
    %v1127 = vmul.f32 %v1095, %v1123
    %v1128 = vmul.f32 %v1096, %v1124
    %v1129 = vpack.c.bf16 %v1127, %v1125
    %v1130 = vpack.c.bf16 %v1128, %v1126
    %v1131 = vld [vmem:[#allocation13] sm:$0xf]
    %v1132 = vld [vmem:[#allocation13 + $0x4] sm:$0xf]
    %v1133 = vld [vmem:[#allocation13 + $0x8] sm:$0xf]
    %v1134 = vld [vmem:[#allocation13 + $0xc] sm:$0xf]
    %v1135 = vld [vmem:[#allocation13 + $0x10] sm:$0xf]
    %v1136 = vld [vmem:[#allocation13 + $0x14] sm:$0xf]
    %v1137 = vld [vmem:[#allocation13 + $0x18] sm:$0xf]
    %v1138 = vld [vmem:[#allocation13 + $0x1c] sm:$0xf]
    %v1139 = vld [vmem:[#allocation13 + $0x20] sm:$0xf]
    %v1140 = vld [vmem:[#allocation13 + $0x24] sm:$0xf]
    %v1141 = vld [vmem:[#allocation13 + $0x28] sm:$0xf]
    %v1142 = vld [vmem:[#allocation13 + $0x2c] sm:$0xf]
    %v1143 = vld [vmem:[#allocation13 + $0x30] sm:$0xf]
    %v1144 = vld [vmem:[#allocation13 + $0x34] sm:$0xf]
    %v1145 = vld [vmem:[#allocation13 + $0x38] sm:$0xf]
    %v1146 = vld [vmem:[#allocation13 + $0x3c] sm:$0xf]
    %v1147 = vld [vmem:[#allocation13 + $0x40] sm:$0xf]
    %v1148 = vld [vmem:[#allocation13 + $0x44] sm:$0xf]
    %v1149 = vld [vmem:[#allocation13 + $0x48] sm:$0xf]
    %v1150 = vld [vmem:[#allocation13 + $0x4c] sm:$0xf]
    %v1151 = vld [vmem:[#allocation13 + $0x50] sm:$0xf]
    %v1152 = vld [vmem:[#allocation13 + $0x54] sm:$0xf]
    %v1153 = vld [vmem:[#allocation13 + $0x58] sm:$0xf]
    %v1154 = vld [vmem:[#allocation13 + $0x5c] sm:$0xf]
    %v1155 = vld [vmem:[#allocation13 + $0x60] sm:$0xf]
    %v1156 = vld [vmem:[#allocation13 + $0x64] sm:$0xf]
    %v1157 = vld [vmem:[#allocation13 + $0x68] sm:$0xf]
    %v1158 = vld [vmem:[#allocation13 + $0x6c] sm:$0xf]
    %v1159 = vld [vmem:[#allocation13 + $0x70] sm:$0xf]
    %v1160 = vld [vmem:[#allocation13 + $0x74] sm:$0xf]
    %v1161 = vld [vmem:[#allocation13 + $0x78] sm:$0xf]
    %v1162 = vld [vmem:[#allocation13 + $0x7c] sm:$0xf]
    %v1163 = vld [vmem:[%s10] sm:$0x1]
    %v1165 = vperm.slane %v1163, 0
    %v1199 = vunpack.c.l.b16 %v1131
    %v1200 = vunpack.c.l.b16 %v1132
    %v1201 = vunpack.c.l.b16 %v1133
    %v1202 = vunpack.c.l.b16 %v1134
    %v1203 = vunpack.c.l.b16 %v1135
    %v1204 = vunpack.c.l.b16 %v1136
    %v1205 = vunpack.c.l.b16 %v1137
    %v1206 = vunpack.c.l.b16 %v1138
    %v1207 = vunpack.c.l.b16 %v1139
    %v1208 = vunpack.c.l.b16 %v1140
    %v1209 = vunpack.c.l.b16 %v1141
    %v1210 = vunpack.c.l.b16 %v1142
    %v1211 = vunpack.c.l.b16 %v1143
    %v1212 = vunpack.c.l.b16 %v1144
    %v1213 = vunpack.c.l.b16 %v1145
    %v1214 = vunpack.c.l.b16 %v1146
    %v1215 = vunpack.c.l.b16 %v1147
    %v1216 = vunpack.c.l.b16 %v1148
    %v1217 = vunpack.c.l.b16 %v1149
    %v1218 = vunpack.c.l.b16 %v1150
    %v1219 = vunpack.c.l.b16 %v1151
    %v1220 = vunpack.c.l.b16 %v1152
    %v1221 = vunpack.c.l.b16 %v1153
    %v1222 = vunpack.c.l.b16 %v1154
    %v1223 = vunpack.c.l.b16 %v1155
    %v1224 = vunpack.c.l.b16 %v1156
    %v1225 = vunpack.c.l.b16 %v1157
    %v1226 = vunpack.c.l.b16 %v1158
    %v1227 = vunpack.c.l.b16 %v1159
    %v1228 = vunpack.c.l.b16 %v1160
    %v1229 = vunpack.c.l.b16 %v1161
    %v1230 = vunpack.c.l.b16 %v1162
    %v1231 = vpack.c.b16 %v1200, %v1199
    %v1232 = vpack.c.b16 %v1202, %v1201
    %v1233 = vpack.c.b16 %v1204, %v1203
    %v1234 = vpack.c.b16 %v1206, %v1205
    %v1235 = vpack.c.b16 %v1208, %v1207
    %v1236 = vpack.c.b16 %v1210, %v1209
    %v1237 = vpack.c.b16 %v1212, %v1211
    %v1238 = vpack.c.b16 %v1214, %v1213
    %v1239 = vpack.c.b16 %v1216, %v1215
    %v1240 = vpack.c.b16 %v1218, %v1217
    %v1241 = vpack.c.b16 %v1220, %v1219
    %v1242 = vpack.c.b16 %v1222, %v1221
    %v1243 = vpack.c.b16 %v1224, %v1223
    %v1244 = vpack.c.b16 %v1226, %v1225
    %v1245 = vpack.c.b16 %v1228, %v1227
    %v1246 = vpack.c.b16 %v1230, %v1229
    %1263 = vmatpush.bf16.msra.mxu0 %v1238
    %1264 = vmatpush.bf16.msra.mxu0 %v1237
    %1265 = vmatpush.bf16.msra.mxu0 %v1236
    %1266 = vmatpush.bf16.msra.mxu0 %v1235
    %1267 = vmatpush.bf16.msra.mxu0 %v1234
    %1268 = vmatpush.bf16.msra.mxu0 %v1233
    %1269 = vmatpush.bf16.msra.mxu0 %v1232
    %1270 = vmatpush.bf16.msra.mxu0 %v1231
    %1271 = vmatmul.bf16.gmra.mxu0 %v1129
    %v1272 = vpop.f32.mrf.mxu0
    %v1273 = vadd.f32 %v1165, %v1272
    %v1274 = vpop.f32.mrf.mxu0
    %v1275 = vadd.f32 %v1165, %v1274
    %1276 = vdwg.mxu0
    %1277 = vmatpush.bf16.msra.mxu0 %v1246
    %1278 = vmatpush.bf16.msra.mxu0 %v1245
    %1279 = vmatpush.bf16.msra.mxu0 %v1244
    %1280 = vmatpush.bf16.msra.mxu0 %v1243
    %1281 = vmatpush.bf16.msra.mxu0 %v1242
    %1282 = vmatpush.bf16.msra.mxu0 %v1241
    %1283 = vmatpush.bf16.msra.mxu0 %v1240
    %1284 = vmatpush.bf16.msra.mxu0 %v1239
    %1285 = vmatmul.bf16.gmra.mxu0 %v1130
    %v1286 = vpop.f32.mrf.mxu0
    %v1287 = vadd.f32 %v1273, %v1286
    %v1288 = vpop.f32.mrf.mxu0
    %v1289 = vadd.f32 %v1275, %v1288
    %1290 = vdwg.mxu0
    %1291 = vst [vmem:[#allocation14] sm:$0xff] %v1287
    %1292 = vst [vmem:[#allocation14 + $0x8] sm:$0xff] %v1289
    // Predicated region
    $region74: #{tpu_custom_call.1} parent=1 // pred_check
      _
    $region75: #{tpu_custom_call.1} parent=1 // pred_check_branch
      %1294 = sbr.rel (0) target = $region77
    $region76: #{tpu_custom_call.1} parent=1 // pred_region
      %1296 = vsyncadd [#allocation4], 0
      %s1297 = sshll.u32 [#allocation14], 4
      %s1298 = int_to_ptr.vmem [resolvable:$true] %s1297
      %s1299 = sshll.u32 %s11, 4
      %s1300 = int_to_ptr.hbm [resolvable:$true] %s1299
      %1305 = dma.vmem_to_hbm [thread:$0]  %s1298, 256, %s1300, [#allocation4], 128, 128, 8
    $region77: #{tpu_custom_call.1} parent=1 // pred_fallthru
      _
    // Predicated region
    $region78: #{tpu_custom_call.1} parent=1 // pred_check
      _
    $region79: #{tpu_custom_call.1} parent=1 // pred_check_branch
      %1307 = sbr.rel (0) target = $region81
    $region80: #{tpu_custom_call.1} parent=1 // pred_region
      %1309 = dma.done [#allocation4], 256
    $region81: #{tpu_custom_call.1} parent=1 // pred_fallthru
      _
    %1310 = vsyncpa [#allocation3], 1
    %1311 = vsyncpa [#allocation6], 1
    %1312 = vsyncpa [#allocation9], 1
    %1313 = vsyncpa [#allocation12], 1
    %1314 = vsyncpa [#allocation4], 1

</llo_original>
